<compile_context>
chip_gen: v7x
topology: tpu7x:2x2x1
jax: 0.10.0
libtpu: 0.0.40
codegen_flags: <defaults>
</compile_context>

<pallas_src>
import functools
import math

import jax
import jax.numpy as jnp
import numpy as np
from jax import lax
from jax.experimental import pallas as pl
from jax.experimental.pallas import tpu as pltpu


def _heads_per_group(num_heads, head_dim, max_width=256):
    """Largest divisor G of num_heads with G*head_dim <= MXU width (256)."""
    best = 1
    for g in range(1, num_heads + 1):
        if num_heads % g == 0 and g * head_dim <= max_width:
            best = g
    return best


# ---------------------------------------------------------------------------
# Phase 1: grouped-head QKV projection (weights N-tiled by head group).
# ---------------------------------------------------------------------------
def qkv_proj_kernel(x_ref, wq_ref, bq_ref, wk_ref, bk_ref, wv_ref, bv_ref,
                    q_ref, k_ref, v_ref, *, heads_per_group, head_dim,
                    compute_dtype):
    # x_ref: (T, E); w*_ref: (E, G*Dh) already in compute dtype (scale folded
    # into wq/bq); b*_ref: (1, G*Dh) f32; outputs: (G, T, Dh) in compute dtype.
    x = x_ref[...].astype(compute_dtype)

    def proj(w_ref, b_ref):
        return jnp.dot(x, w_ref[...], preferred_element_type=jnp.float32) + b_ref[...]

    qg = proj(wq_ref, bq_ref)            # (T, G*Dh) f32, pre-scaled via weights
    kg = proj(wk_ref, bk_ref)
    vg = proj(wv_ref, bv_ref)

    # Static per-head column slices -> split-head "present" layout, no HBM
    # transpose pass.
    for j in range(heads_per_group):
        sl = slice(j * head_dim, (j + 1) * head_dim)
        q_ref[j] = qg[:, sl].astype(q_ref.dtype)
        k_ref[j] = kg[:, sl].astype(k_ref.dtype)
        v_ref[j] = vg[:, sl].astype(v_ref.dtype)


# ---------------------------------------------------------------------------
# Phase 2: causal flash attention (in-kernel key-block loop) + fused c_proj.
# ---------------------------------------------------------------------------
def flash_attn_cproj_kernel(q_ref, k_ref, v_ref, wp_ref, bp_ref, out_ref,
                            out_acc, *, block_q, block_k, num_heads,
                            compute_dtype, approx_recip):
    qi = pl.program_id(1)               # query tile
    h = pl.program_id(2)                # head (innermost; c_proj reduction axis)
    head_dim = q_ref.shape[-1]
    diag_blocks = block_q // block_k    # static: blocks straddling the diagonal
    q_start = qi * block_q

    q = q_ref[...]                       # (block_q, Dh), compute dtype, pre-scaled

    def attend(block_idx, carry, masked):
        m_prev, l_prev, acc_prev = carry
        ks = pl.multiple_of(block_idx * block_k, block_k)
        k = k_ref[pl.ds(ks, block_k), :]                     # (block_k, Dh)
        v = v_ref[pl.ds(ks, block_k), :]
        s = lax.dot_general(q, k, (((1,), (1,)), ((), ())),
                            preferred_element_type=jnp.float32)
        if masked:                       # only diagonal-straddling block(s)
            row = q_start + lax.broadcasted_iota(jnp.int32, (block_q, block_k), 0)
            col = ks + lax.broadcasted_iota(jnp.int32, (block_q, block_k), 1)
            s = jnp.where(row >= col, s, -jnp.inf)
        m_new = jnp.maximum(m_prev, jnp.max(s, axis=-1, keepdims=True))
        alpha = jnp.exp(m_prev - m_new)                      # f32 softmax math
        p = jnp.exp(s - m_new)
        l_new = alpha * l_prev + jnp.sum(p, axis=-1, keepdims=True)
        acc_new = alpha * acc_prev + jnp.dot(p.astype(compute_dtype), v,
                                             preferred_element_type=jnp.float32)
        return m_new, l_new, acc_new

    carry = (jnp.full((block_q, 1), -jnp.inf, jnp.float32),
             jnp.zeros((block_q, 1), jnp.float32),
             jnp.zeros((block_q, head_dim), jnp.float32))

    # Fully-unmasked key blocks strictly below the diagonal (no iota/where).
    num_full = qi * diag_blocks
    carry = lax.fori_loop(0, num_full,
                          lambda i, c: attend(i, c, masked=False), carry)
    # Diagonal block(s): the only place the causal mask is materialized.
    for j in range(diag_blocks):
        carry = attend(num_full + j, carry, masked=True)

    _, l, acc = carry
    o_h = acc * pl.reciprocal(l, approx=approx_recip)        # (block_q, Dh) f32
    # Fold this head straight into c_proj; Wp is resident (constant index map).
    contrib = jnp.dot(o_h.astype(compute_dtype), wp_ref[h],
                      preferred_element_type=jnp.float32)    # (block_q, E)

    @pl.when(h == 0)
    def _():
        out_acc[...] = bp_ref[...] + contrib

    @pl.when(h > 0)
    def _():
        out_acc[...] = out_acc[...] + contrib

    @pl.when(h == num_heads - 1)
    def _():
        out_ref[...] = out_acc[...].astype(out_ref.dtype)


# ---------------------------------------------------------------------------
# Host-side packing (one-time): PyTorch nn.Linear layout -> kernel layout.
# ---------------------------------------------------------------------------
def pack_params(params, num_heads, head_dim, *, compute_dtype=jnp.bfloat16):
    E = num_heads * head_dim
    G = _heads_per_group(num_heads, head_dim)
    scale = 1.0 / math.sqrt(head_dim)

    def qkv(w, b, s):
        # nn.Linear: y = x @ w.T + b, w: (E_out, E_in). Head h owns output cols
        # [h*Dh, (h+1)*Dh). Pack per head-group as (H/G, E_in, G*Dh).
        w_t = jnp.transpose(w) * s                                 # (E_in, E_out)
        w_g = jnp.transpose(w_t.reshape(E, num_heads // G, G * head_dim),
                            (1, 0, 2))                             # (H/G, E, G*Dh)
        b_g = (b * s).reshape(num_heads // G, 1, G * head_dim)
        return w_g.astype(compute_dtype), b_g.astype(jnp.float32)

    wq, bq = qkv(params["wq"], params["bq"], scale)   # 1/sqrt(Dh) folded here
    wk, bk = qkv(params["wk"], params["bk"], 1.0)
    wv, bv = qkv(params["wv"], params["bv"], 1.0)
    # c_proj: y = merged_attn @ wp.T + bp; head h feeds rows [h*Dh,(h+1)*Dh) of wp.T.
    wp = jnp.transpose(params["wp"]).reshape(num_heads, head_dim, E).astype(compute_dtype)
    bp = params["bp"].reshape(1, E).astype(jnp.float32)
    return dict(wq=wq, bq=bq, wk=wk, bk=bk, wv=wv, bv=bv, wp=wp, bp=bp)


def gpt2_attention_forward(x, packed, num_heads, head_dim, *,
                           compute_dtype=jnp.bfloat16, block_q=None, block_k=None):
    """x: (B, T, E) f32. Returns (attn_output (B,T,E) f32,
    (key, value) (B,H,T,Dh) in compute_dtype — the "present" cache)."""
    B, T, E = x.shape
    assert E == num_heads * head_dim
    Dh = head_dim

    if block_k is None:
        block_k = min(T, 256)
    if block_q is None:
        block_q = min(T, 256)   # TODO(synk): sweep 256->512 on v6e/v7x
    assert T % block_k == 0 and T % block_q == 0 and block_q % block_k == 0
    nq = T // block_q

    G = _heads_per_group(num_heads, head_dim)
    num_groups = num_heads // G
    approx_recip = jnp.dtype(compute_dtype) == jnp.dtype(jnp.bfloat16)

    # ------------------- Phase 1: grouped-head QKV projection ----------------
    k1 = functools.partial(qkv_proj_kernel, heads_per_group=G, head_dim=Dh,
                           compute_dtype=compute_dtype)

    x_spec = pl.BlockSpec((pl.Squeezed(), T, E), lambda b, g: (b, 0, 0))
    w_spec = pl.BlockSpec((pl.Squeezed(), E, G * Dh), lambda b, g: (g, 0, 0))
    b_spec = pl.BlockSpec((pl.Squeezed(), 1, G * Dh), lambda b, g: (g, 0, 0))
    hd_out = pl.BlockSpec((pl.Squeezed(), G, T, Dh), lambda b, g: (b, g, 0, 0))

    q_scaled, key, value = pl.pallas_call(
        k1,
        grid=(B, num_groups),
        in_specs=[x_spec, w_spec, b_spec, w_spec, b_spec, w_spec, b_spec],
        out_specs=(hd_out, hd_out, hd_out),
        out_shape=(
            jax.ShapeDtypeStruct((B, num_heads, T, Dh), compute_dtype),  # q (scaled)
            jax.ShapeDtypeStruct((B, num_heads, T, Dh), compute_dtype),  # present key
            jax.ShapeDtypeStruct((B, num_heads, T, Dh), compute_dtype),  # present value
        ),
        compiler_params=pltpu.CompilerParams(
            dimension_semantics=("parallel", "parallel"),
            vmem_limit_bytes=32 * 1024 * 1024),
    )(x, packed["wq"], packed["bq"], packed["wk"], packed["bk"],
      packed["wv"], packed["bv"])

    # ------------- Phase 2: flash attention + fused output projection --------
    k2 = functools.partial(flash_attn_cproj_kernel, block_q=block_q,
                           block_k=block_k, num_heads=num_heads,
                           compute_dtype=compute_dtype, approx_recip=approx_recip)

    q_spec = pl.BlockSpec((pl.Squeezed(), pl.Squeezed(), block_q, Dh),
                          lambda b, qi, h: (b, h, qi, 0))
    kv_spec = pl.BlockSpec((pl.Squeezed(), pl.Squeezed(), T, Dh),
                           lambda b, qi, h: (b, h, 0, 0))
    wp_spec = pl.BlockSpec((num_heads, Dh, E), lambda b, qi, h: (0, 0, 0))
    bp_spec = pl.BlockSpec((1, E), lambda b, qi, h: (0, 0))
    out_spec = pl.BlockSpec((pl.Squeezed(), block_q, E), lambda b, qi, h: (b, qi, 0))

    attn_out = pl.pallas_call(
        k2,
        grid=(B, nq, num_heads),
        in_specs=[q_spec, kv_spec, kv_spec, wp_spec, bp_spec],
        out_specs=out_spec,
        out_shape=jax.ShapeDtypeStruct((B, T, E), jnp.float32),
        scratch_shapes=[pltpu.VMEM((block_q, E), jnp.float32)],   # cross-head c_proj acc
        compiler_params=pltpu.CompilerParams(
            dimension_semantics=("parallel", "parallel", "arbitrary"),
            vmem_limit_bytes=32 * 1024 * 1024),
    )(q_scaled, key, value, packed["wp"], packed["bp"])

    return attn_out, (key, value)


# ---------------------------------------------------------------------------
# Pure-JAX reference mirroring the PyTorch module (eval mode, f32).
# ---------------------------------------------------------------------------
def reference_forward(x, params, num_heads, head_dim):
    B, T, E = x.shape
    q = x @ params["wq"].T + params["bq"]
    k = x @ params["wk"].T + params["bk"]
    v = x @ params["wv"].T + params["bv"]

    def split(t):
        return t.reshape(B, T, num_heads, head_dim).transpose(0, 2, 1, 3)

    qh, kh, vh = split(q), split(k), split(v)
    s = jnp.einsum("bhqd,bhkd->bhqk", qh, kh) / math.sqrt(head_dim)
    causal = jnp.tril(jnp.ones((T, T), dtype=bool))[None, None]
    s = jnp.where(causal, s, -jnp.inf)
    p = jax.nn.softmax(s, axis=-1)
    o = jnp.einsum("bhqk,bhkd->bhqd", p, vh)
    o = o.transpose(0, 2, 1, 3).reshape(B, T, E)
    out = o @ params["wp"].T + params["bp"]
    return out, (kh, vh)


def init_params(key, embed_dim):
    ks = jax.random.split(key, 8)
    std = 0.02

    def lin(kw, kb):
        w = jax.random.normal(kw, (embed_dim, embed_dim), jnp.float32) * std
        b = jax.random.normal(kb, (embed_dim,), jnp.float32) * std
        return w, b

    wq, bq = lin(ks[0], ks[1])
    wk, bk = lin(ks[2], ks[3])
    wv, bv = lin(ks[4], ks[5])
    wp, bp = lin(ks[6], ks[7])
    return dict(wq=wq, bq=bq, wk=wk, bk=bk, wv=wv, bv=bv, wp=wp, bp=bp)


if __name__ == "__main__":
    # Small demo shapes: batch=2, seq(block_size)=8, hidden=32, heads=4, head_dim=8.
    # (Real GPT-2 sizes, e.g. T=1024, E=768, Dh=64, use the same code path with
    #  block_q = block_k = 256 and a 2-head-per-step Phase-1 weight slab.)
    B, T, E, H = 2, 8, 32, 4
    Dh = E // H

    root = jax.random.PRNGKey(0)
    kx, kp = jax.random.split(root)
    x = jax.random.normal(kx, (B, T, E), jnp.float32)
    params = init_params(kp, E)

    ref_out, (ref_k, ref_v) = reference_forward(x, params, H, Dh)

    # f32 compute path: tight check against the (f32) module semantics.
    packed32 = pack_params(params, H, Dh, compute_dtype=jnp.float32)
    out32, (k32, v32) = gpt2_attention_forward(x, packed32, H, Dh,
                                               compute_dtype=jnp.float32)
    jax.block_until_ready(out32)
    np.testing.assert_allclose(np.asarray(out32), np.asarray(ref_out),
                               rtol=1e-4, atol=1e-5)
    np.testing.assert_allclose(np.asarray(k32), np.asarray(ref_k),
                               rtol=1e-5, atol=1e-5)
    np.testing.assert_allclose(np.asarray(v32), np.asarray(ref_v),
                               rtol=1e-5, atol=1e-5)

    # bf16 MXU path (f32 accumulation + f32 softmax): the performance config.
    # Note: present K/V are returned in bf16 on this path.
    packed16 = pack_params(params, H, Dh, compute_dtype=jnp.bfloat16)
    out16, (k16, v16) = gpt2_attention_forward(x, packed16, H, Dh,
                                               compute_dtype=jnp.bfloat16)
    jax.block_until_ready(out16)
    jax.block_until_ready(k16)
    jax.block_until_ready(v16)
    np.testing.assert_allclose(np.asarray(out16), np.asarray(ref_out),
                               rtol=5e-2, atol=5e-3)
    np.testing.assert_allclose(np.asarray(k16.astype(jnp.float32)), np.asarray(ref_k),
                               rtol=5e-2, atol=5e-3)
    np.testing.assert_allclose(np.asarray(v16.astype(jnp.float32)), np.asarray(ref_v),
                               rtol=5e-2, atol=5e-3)

    print("KERNEL_OK")
</pallas_src>

<mosaic_0001>
module attributes {stable_mosaic.version = 11 : i64} {
  func.func @qkv_proj_kernel(%arg0: i32, %arg1: i32, %arg2: memref<1x8x32xf32, #tpu.memory_space<vmem>>, %arg3: memref<1x32x32xf32, #tpu.memory_space<vmem>>, %arg4: memref<1x1x32xf32, #tpu.memory_space<vmem>>, %arg5: memref<1x32x32xf32, #tpu.memory_space<vmem>>, %arg6: memref<1x1x32xf32, #tpu.memory_space<vmem>>, %arg7: memref<1x32x32xf32, #tpu.memory_space<vmem>>, %arg8: memref<1x1x32xf32, #tpu.memory_space<vmem>>, %arg9: memref<1x4x8x8xf32, #tpu.memory_space<vmem>>, %arg10: memref<1x4x8x8xf32, #tpu.memory_space<vmem>>, %arg11: memref<1x4x8x8xf32, #tpu.memory_space<vmem>>) attributes {dimension_semantics = [#tpu.dimension_semantics<parallel>, #tpu.dimension_semantics<parallel>], iteration_bounds = array<i64: 2, 1>, scalar_prefetch = 0 : i64, scratch_operands = 0 : i64, tpu.core_type = #tpu.core_type<tc>, window_params = [{transform_indices = @transform_0, window_bounds = array<i64: 1, 8, 32>}, {transform_indices = @transform_1, window_bounds = array<i64: 1, 32, 32>}, {transform_indices = @transform_2, window_bounds = array<i64: 1, 1, 32>}, {transform_indices = @transform_3, window_bounds = array<i64: 1, 32, 32>}, {transform_indices = @transform_4, window_bounds = array<i64: 1, 1, 32>}, {transform_indices = @transform_5, window_bounds = array<i64: 1, 32, 32>}, {transform_indices = @transform_6, window_bounds = array<i64: 1, 1, 32>}, {transform_indices = @transform_7, window_bounds = array<i64: 1, 4, 8, 8>}, {transform_indices = @transform_8, window_bounds = array<i64: 1, 4, 8, 8>}, {transform_indices = @transform_9, window_bounds = array<i64: 1, 4, 8, 8>}]} {
    %c0 = arith.constant 0 : index
    %c0_0 = arith.constant 0 : index
    %c0_1 = arith.constant 0 : index
    %0 = vector.load %arg2[%c0, %c0_0, %c0_1] : memref<1x8x32xf32, #tpu.memory_space<vmem>>, vector<1x8x32xf32>
    %1 = vector.shape_cast %0 : vector<1x8x32xf32> to vector<8x32xf32>
    %c0_2 = arith.constant 0 : index
    %c0_3 = arith.constant 0 : index
    %c0_4 = arith.constant 0 : index
    %2 = vector.load %arg3[%c0_2, %c0_3, %c0_4] : memref<1x32x32xf32, #tpu.memory_space<vmem>>, vector<1x32x32xf32>
    %3 = vector.shape_cast %2 : vector<1x32x32xf32> to vector<32x32xf32>
    %cst = arith.constant dense<0.000000e+00> : vector<8x32xf32>
    %4 = tpu.matmul %1, %3, %cst {dimension_numbers = #tpu.dot_dimension_numbers<[1], [0], [0], [1], [0, 0, 1, 1], [], []>} : vector<8x32xf32>, vector<32x32xf32>, vector<8x32xf32> -> vector<8x32xf32>
    %c0_5 = arith.constant 0 : index
    %c0_6 = arith.constant 0 : index
    %c0_7 = arith.constant 0 : index
    %5 = vector.load %arg4[%c0_5, %c0_6, %c0_7] : memref<1x1x32xf32, #tpu.memory_space<vmem>>, vector<1x1x32xf32>
    %6 = vector.shape_cast %5 : vector<1x1x32xf32> to vector<1x32xf32>
    %7 = vector.broadcast %6 : vector<1x32xf32> to vector<8x32xf32>
    %8 = arith.addf %4, %7 : vector<8x32xf32>
    %c0_8 = arith.constant 0 : index
    %c0_9 = arith.constant 0 : index
    %c0_10 = arith.constant 0 : index
    %9 = vector.load %arg5[%c0_8, %c0_9, %c0_10] : memref<1x32x32xf32, #tpu.memory_space<vmem>>, vector<1x32x32xf32>
    %10 = vector.shape_cast %9 : vector<1x32x32xf32> to vector<32x32xf32>
    %cst_11 = arith.constant dense<0.000000e+00> : vector<8x32xf32>
    %11 = tpu.matmul %1, %10, %cst_11 {dimension_numbers = #tpu.dot_dimension_numbers<[1], [0], [0], [1], [0, 0, 1, 1], [], []>} : vector<8x32xf32>, vector<32x32xf32>, vector<8x32xf32> -> vector<8x32xf32>
    %c0_12 = arith.constant 0 : index
    %c0_13 = arith.constant 0 : index
    %c0_14 = arith.constant 0 : index
    %12 = vector.load %arg6[%c0_12, %c0_13, %c0_14] : memref<1x1x32xf32, #tpu.memory_space<vmem>>, vector<1x1x32xf32>
    %13 = vector.shape_cast %12 : vector<1x1x32xf32> to vector<1x32xf32>
    %14 = vector.broadcast %13 : vector<1x32xf32> to vector<8x32xf32>
    %15 = arith.addf %11, %14 : vector<8x32xf32>
    %c0_15 = arith.constant 0 : index
    %c0_16 = arith.constant 0 : index
    %c0_17 = arith.constant 0 : index
    %16 = vector.load %arg7[%c0_15, %c0_16, %c0_17] : memref<1x32x32xf32, #tpu.memory_space<vmem>>, vector<1x32x32xf32>
    %17 = vector.shape_cast %16 : vector<1x32x32xf32> to vector<32x32xf32>
    %cst_18 = arith.constant dense<0.000000e+00> : vector<8x32xf32>
    %18 = tpu.matmul %1, %17, %cst_18 {dimension_numbers = #tpu.dot_dimension_numbers<[1], [0], [0], [1], [0, 0, 1, 1], [], []>} : vector<8x32xf32>, vector<32x32xf32>, vector<8x32xf32> -> vector<8x32xf32>
    %c0_19 = arith.constant 0 : index
    %c0_20 = arith.constant 0 : index
    %c0_21 = arith.constant 0 : index
    %19 = vector.load %arg8[%c0_19, %c0_20, %c0_21] : memref<1x1x32xf32, #tpu.memory_space<vmem>>, vector<1x1x32xf32>
    %20 = vector.shape_cast %19 : vector<1x1x32xf32> to vector<1x32xf32>
    %21 = vector.broadcast %20 : vector<1x32xf32> to vector<8x32xf32>
    %22 = arith.addf %18, %21 : vector<8x32xf32>
    %23 = vector.extract_strided_slice %8 {offsets = [0, 0], sizes = [8, 8], strides = [1, 1]} : vector<8x32xf32> to vector<8x8xf32>
    %c0_22 = arith.constant 0 : index
    %c0_23 = arith.constant 0 : index
    %c0_24 = arith.constant 0 : index
    %c0_25 = arith.constant 0 : index
    %24 = vector.load %arg9[%c0_22, %c0_23, %c0_24, %c0_25] : memref<1x4x8x8xf32, #tpu.memory_space<vmem>>, vector<1x1x8x8xf32>
    %25 = vector.shape_cast %24 : vector<1x1x8x8xf32> to vector<8x8xf32>
    %26 = vector.shape_cast %23 : vector<8x8xf32> to vector<1x1x8x8xf32>
    tpu.vector_store %arg9[%c0_22, %c0_23, %c0_24, %c0_25], %26 {strides = array<i32>} : memref<1x4x8x8xf32, #tpu.memory_space<vmem>>, vector<1x1x8x8xf32>,
    %27 = vector.extract_strided_slice %15 {offsets = [0, 0], sizes = [8, 8], strides = [1, 1]} : vector<8x32xf32> to vector<8x8xf32>
    %c0_26 = arith.constant 0 : index
    %c0_27 = arith.constant 0 : index
    %c0_28 = arith.constant 0 : index
    %c0_29 = arith.constant 0 : index
    %28 = vector.load %arg10[%c0_26, %c0_27, %c0_28, %c0_29] : memref<1x4x8x8xf32, #tpu.memory_space<vmem>>, vector<1x1x8x8xf32>
    %29 = vector.shape_cast %28 : vector<1x1x8x8xf32> to vector<8x8xf32>
    %30 = vector.shape_cast %27 : vector<8x8xf32> to vector<1x1x8x8xf32>
    tpu.vector_store %arg10[%c0_26, %c0_27, %c0_28, %c0_29], %30 {strides = array<i32>} : memref<1x4x8x8xf32, #tpu.memory_space<vmem>>, vector<1x1x8x8xf32>,
    %31 = vector.extract_strided_slice %22 {offsets = [0, 0], sizes = [8, 8], strides = [1, 1]} : vector<8x32xf32> to vector<8x8xf32>
    %c0_30 = arith.constant 0 : index
    %c0_31 = arith.constant 0 : index
    %c0_32 = arith.constant 0 : index
    %c0_33 = arith.constant 0 : index
    %32 = vector.load %arg11[%c0_30, %c0_31, %c0_32, %c0_33] : memref<1x4x8x8xf32, #tpu.memory_space<vmem>>, vector<1x1x8x8xf32>
    %33 = vector.shape_cast %32 : vector<1x1x8x8xf32> to vector<8x8xf32>
    %34 = vector.shape_cast %31 : vector<8x8xf32> to vector<1x1x8x8xf32>
    tpu.vector_store %arg11[%c0_30, %c0_31, %c0_32, %c0_33], %34 {strides = array<i32>} : memref<1x4x8x8xf32, #tpu.memory_space<vmem>>, vector<1x1x8x8xf32>,
    %35 = vector.extract_strided_slice %8 {offsets = [0, 8], sizes = [8, 8], strides = [1, 1]} : vector<8x32xf32> to vector<8x8xf32>
    %c0_34 = arith.constant 0 : index
    %c1 = arith.constant 1 : index
    %c0_35 = arith.constant 0 : index
    %c0_36 = arith.constant 0 : index
    %36 = vector.load %arg9[%c0_34, %c1, %c0_35, %c0_36] : memref<1x4x8x8xf32, #tpu.memory_space<vmem>>, vector<1x1x8x8xf32>
    %37 = vector.shape_cast %36 : vector<1x1x8x8xf32> to vector<8x8xf32>
    %38 = vector.shape_cast %35 : vector<8x8xf32> to vector<1x1x8x8xf32>
    tpu.vector_store %arg9[%c0_34, %c1, %c0_35, %c0_36], %38 {strides = array<i32>} : memref<1x4x8x8xf32, #tpu.memory_space<vmem>>, vector<1x1x8x8xf32>,
    %39 = vector.extract_strided_slice %15 {offsets = [0, 8], sizes = [8, 8], strides = [1, 1]} : vector<8x32xf32> to vector<8x8xf32>
    %c0_37 = arith.constant 0 : index
    %c1_38 = arith.constant 1 : index
    %c0_39 = arith.constant 0 : index
    %c0_40 = arith.constant 0 : index
    %40 = vector.load %arg10[%c0_37, %c1_38, %c0_39, %c0_40] : memref<1x4x8x8xf32, #tpu.memory_space<vmem>>, vector<1x1x8x8xf32>
    %41 = vector.shape_cast %40 : vector<1x1x8x8xf32> to vector<8x8xf32>
    %42 = vector.shape_cast %39 : vector<8x8xf32> to vector<1x1x8x8xf32>
    tpu.vector_store %arg10[%c0_37, %c1_38, %c0_39, %c0_40], %42 {strides = array<i32>} : memref<1x4x8x8xf32, #tpu.memory_space<vmem>>, vector<1x1x8x8xf32>,
    %43 = vector.extract_strided_slice %22 {offsets = [0, 8], sizes = [8, 8], strides = [1, 1]} : vector<8x32xf32> to vector<8x8xf32>
    %c0_41 = arith.constant 0 : index
    %c1_42 = arith.constant 1 : index
    %c0_43 = arith.constant 0 : index
    %c0_44 = arith.constant 0 : index
    %44 = vector.load %arg11[%c0_41, %c1_42, %c0_43, %c0_44] : memref<1x4x8x8xf32, #tpu.memory_space<vmem>>, vector<1x1x8x8xf32>
    %45 = vector.shape_cast %44 : vector<1x1x8x8xf32> to vector<8x8xf32>
    %46 = vector.shape_cast %43 : vector<8x8xf32> to vector<1x1x8x8xf32>
    tpu.vector_store %arg11[%c0_41, %c1_42, %c0_43, %c0_44], %46 {strides = array<i32>} : memref<1x4x8x8xf32, #tpu.memory_space<vmem>>, vector<1x1x8x8xf32>,
    %47 = vector.extract_strided_slice %8 {offsets = [0, 16], sizes = [8, 8], strides = [1, 1]} : vector<8x32xf32> to vector<8x8xf32>
    %c0_45 = arith.constant 0 : index
    %c2 = arith.constant 2 : index
    %c0_46 = arith.constant 0 : index
    %c0_47 = arith.constant 0 : index
    %48 = vector.load %arg9[%c0_45, %c2, %c0_46, %c0_47] : memref<1x4x8x8xf32, #tpu.memory_space<vmem>>, vector<1x1x8x8xf32>
    %49 = vector.shape_cast %48 : vector<1x1x8x8xf32> to vector<8x8xf32>
    %50 = vector.shape_cast %47 : vector<8x8xf32> to vector<1x1x8x8xf32>
    tpu.vector_store %arg9[%c0_45, %c2, %c0_46, %c0_47], %50 {strides = array<i32>} : memref<1x4x8x8xf32, #tpu.memory_space<vmem>>, vector<1x1x8x8xf32>,
    %51 = vector.extract_strided_slice %15 {offsets = [0, 16], sizes = [8, 8], strides = [1, 1]} : vector<8x32xf32> to vector<8x8xf32>
    %c0_48 = arith.constant 0 : index
    %c2_49 = arith.constant 2 : index
    %c0_50 = arith.constant 0 : index
    %c0_51 = arith.constant 0 : index
    %52 = vector.load %arg10[%c0_48, %c2_49, %c0_50, %c0_51] : memref<1x4x8x8xf32, #tpu.memory_space<vmem>>, vector<1x1x8x8xf32>
    %53 = vector.shape_cast %52 : vector<1x1x8x8xf32> to vector<8x8xf32>
    %54 = vector.shape_cast %51 : vector<8x8xf32> to vector<1x1x8x8xf32>
    tpu.vector_store %arg10[%c0_48, %c2_49, %c0_50, %c0_51], %54 {strides = array<i32>} : memref<1x4x8x8xf32, #tpu.memory_space<vmem>>, vector<1x1x8x8xf32>,
    %55 = vector.extract_strided_slice %22 {offsets = [0, 16], sizes = [8, 8], strides = [1, 1]} : vector<8x32xf32> to vector<8x8xf32>
    %c0_52 = arith.constant 0 : index
    %c2_53 = arith.constant 2 : index
    %c0_54 = arith.constant 0 : index
    %c0_55 = arith.constant 0 : index
    %56 = vector.load %arg11[%c0_52, %c2_53, %c0_54, %c0_55] : memref<1x4x8x8xf32, #tpu.memory_space<vmem>>, vector<1x1x8x8xf32>
    %57 = vector.shape_cast %56 : vector<1x1x8x8xf32> to vector<8x8xf32>
    %58 = vector.shape_cast %55 : vector<8x8xf32> to vector<1x1x8x8xf32>
    tpu.vector_store %arg11[%c0_52, %c2_53, %c0_54, %c0_55], %58 {strides = array<i32>} : memref<1x4x8x8xf32, #tpu.memory_space<vmem>>, vector<1x1x8x8xf32>,
    %59 = vector.extract_strided_slice %8 {offsets = [0, 24], sizes = [8, 8], strides = [1, 1]} : vector<8x32xf32> to vector<8x8xf32>
    %c0_56 = arith.constant 0 : index
    %c3 = arith.constant 3 : index
    %c0_57 = arith.constant 0 : index
    %c0_58 = arith.constant 0 : index
    %60 = vector.load %arg9[%c0_56, %c3, %c0_57, %c0_58] : memref<1x4x8x8xf32, #tpu.memory_space<vmem>>, vector<1x1x8x8xf32>
    %61 = vector.shape_cast %60 : vector<1x1x8x8xf32> to vector<8x8xf32>
    %62 = vector.shape_cast %59 : vector<8x8xf32> to vector<1x1x8x8xf32>
    tpu.vector_store %arg9[%c0_56, %c3, %c0_57, %c0_58], %62 {strides = array<i32>} : memref<1x4x8x8xf32, #tpu.memory_space<vmem>>, vector<1x1x8x8xf32>,
    %63 = vector.extract_strided_slice %15 {offsets = [0, 24], sizes = [8, 8], strides = [1, 1]} : vector<8x32xf32> to vector<8x8xf32>
    %c0_59 = arith.constant 0 : index
    %c3_60 = arith.constant 3 : index
    %c0_61 = arith.constant 0 : index
    %c0_62 = arith.constant 0 : index
    %64 = vector.load %arg10[%c0_59, %c3_60, %c0_61, %c0_62] : memref<1x4x8x8xf32, #tpu.memory_space<vmem>>, vector<1x1x8x8xf32>
    %65 = vector.shape_cast %64 : vector<1x1x8x8xf32> to vector<8x8xf32>
    %66 = vector.shape_cast %63 : vector<8x8xf32> to vector<1x1x8x8xf32>
    tpu.vector_store %arg10[%c0_59, %c3_60, %c0_61, %c0_62], %66 {strides = array<i32>} : memref<1x4x8x8xf32, #tpu.memory_space<vmem>>, vector<1x1x8x8xf32>,
    %67 = vector.extract_strided_slice %22 {offsets = [0, 24], sizes = [8, 8], strides = [1, 1]} : vector<8x32xf32> to vector<8x8xf32>
    %c0_63 = arith.constant 0 : index
    %c3_64 = arith.constant 3 : index
    %c0_65 = arith.constant 0 : index
    %c0_66 = arith.constant 0 : index
    %68 = vector.load %arg11[%c0_63, %c3_64, %c0_65, %c0_66] : memref<1x4x8x8xf32, #tpu.memory_space<vmem>>, vector<1x1x8x8xf32>
    %69 = vector.shape_cast %68 : vector<1x1x8x8xf32> to vector<8x8xf32>
    %70 = vector.shape_cast %67 : vector<8x8xf32> to vector<1x1x8x8xf32>
    tpu.vector_store %arg11[%c0_63, %c3_64, %c0_65, %c0_66], %70 {strides = array<i32>} : memref<1x4x8x8xf32, #tpu.memory_space<vmem>>, vector<1x1x8x8xf32>,
    return
  }
  func.func @transform_0(%arg0: i32, %arg1: i32) -> (i32, i32, i32) {
    %c0_i32 = arith.constant 0 : i32
    %c0_i32_0 = arith.constant 0 : i32
    %c0_i32_1 = arith.constant 0 : i32
    return %arg0, %c0_i32, %c0_i32_0 : i32, i32, i32
  }
  func.func @transform_1(%arg0: i32, %arg1: i32) -> (i32, i32, i32) {
    %c0_i32 = arith.constant 0 : i32
    %c0_i32_0 = arith.constant 0 : i32
    %c0_i32_1 = arith.constant 0 : i32
    return %arg1, %c0_i32, %c0_i32_0 : i32, i32, i32
  }
  func.func @transform_2(%arg0: i32, %arg1: i32) -> (i32, i32, i32) {
    %c0_i32 = arith.constant 0 : i32
    %c0_i32_0 = arith.constant 0 : i32
    %c0_i32_1 = arith.constant 0 : i32
    return %arg1, %c0_i32, %c0_i32_0 : i32, i32, i32
  }
  func.func @transform_3(%arg0: i32, %arg1: i32) -> (i32, i32, i32) {
    %c0_i32 = arith.constant 0 : i32
    %c0_i32_0 = arith.constant 0 : i32
    %c0_i32_1 = arith.constant 0 : i32
    return %arg1, %c0_i32, %c0_i32_0 : i32, i32, i32
  }
  func.func @transform_4(%arg0: i32, %arg1: i32) -> (i32, i32, i32) {
    %c0_i32 = arith.constant 0 : i32
    %c0_i32_0 = arith.constant 0 : i32
    %c0_i32_1 = arith.constant 0 : i32
    return %arg1, %c0_i32, %c0_i32_0 : i32, i32, i32
  }
  func.func @transform_5(%arg0: i32, %arg1: i32) -> (i32, i32, i32) {
    %c0_i32 = arith.constant 0 : i32
    %c0_i32_0 = arith.constant 0 : i32
    %c0_i32_1 = arith.constant 0 : i32
    return %arg1, %c0_i32, %c0_i32_0 : i32, i32, i32
  }
  func.func @transform_6(%arg0: i32, %arg1: i32) -> (i32, i32, i32) {
    %c0_i32 = arith.constant 0 : i32
    %c0_i32_0 = arith.constant 0 : i32
    %c0_i32_1 = arith.constant 0 : i32
    return %arg1, %c0_i32, %c0_i32_0 : i32, i32, i32
  }
  func.func @transform_7(%arg0: i32, %arg1: i32) -> (i32, i32, i32, i32) {
    %c0_i32 = arith.constant 0 : i32
    %c0_i32_0 = arith.constant 0 : i32
    %c0_i32_1 = arith.constant 0 : i32
    return %arg0, %arg1, %c0_i32, %c0_i32_0 : i32, i32, i32, i32
  }
  func.func @transform_8(%arg0: i32, %arg1: i32) -> (i32, i32, i32, i32) {
    %c0_i32 = arith.constant 0 : i32
    %c0_i32_0 = arith.constant 0 : i32
    %c0_i32_1 = arith.constant 0 : i32
    return %arg0, %arg1, %c0_i32, %c0_i32_0 : i32, i32, i32, i32
  }
  func.func @transform_9(%arg0: i32, %arg1: i32) -> (i32, i32, i32, i32) {
    %c0_i32 = arith.constant 0 : i32
    %c0_i32_0 = arith.constant 0 : i32
    %c0_i32_1 = arith.constant 0 : i32
    return %arg0, %arg1, %c0_i32, %c0_i32_0 : i32, i32, i32, i32
  }
}

</mosaic_0001>

<llo_original>
// kernel: tpu_custom_call.1
$region0: #{tpu_custom_call.1}
  #allocation0 [shape = 'u32[]', space=smem, size = 0x4, offset = 0x4, fixed_abs, tag = 'smem constant byte address 0x4 - core index']
  #allocation1 [shape = 'u32[144,128]{1,0:T(1,128)}', space=vmem, size = 0x12000, scoped, tag = 'internal scratch']
  %s0 = inlined_call_operand.hbm [shape: f32[2,8,32], index: 0, kind: input, shape index: {}]
  %s1 = inlined_call_operand.hbm [shape: f32[1,32,32], index: 1, kind: input, shape index: {}]
  %s2 = inlined_call_operand.vmem [shape: f32[1,1,32], index: 2, kind: input, shape index: {}]
  %s3 = inlined_call_operand.hbm [shape: f32[1,32,32], index: 3, kind: input, shape index: {}]
  %s4 = inlined_call_operand.vmem [shape: f32[1,1,32], index: 4, kind: input, shape index: {}]
  %s5 = inlined_call_operand.hbm [shape: f32[1,32,32], index: 5, kind: input, shape index: {}]
  %s6 = inlined_call_operand.vmem [shape: f32[1,1,32], index: 6, kind: input, shape index: {}]
  %s7 = inlined_call_operand.hbm [shape: f32[2,4,8,8], index: 7, kind: output, shape index: {0}]
  %s8 = inlined_call_operand.hbm [shape: f32[2,4,8,8], index: 8, kind: output, shape index: {1}]
  %s9 = inlined_call_operand.hbm [shape: f32[2,4,8,8], index: 9, kind: output, shape index: {2}]
  %10 = xla_tuple %s7, %s8, %s9
  %s11 = sld [smem:[#allocation0]]
  $region93: #{tpu_custom_call.1} parent=0
    _
  %s13 = ssub.s32 1, %s11
  %s14 = scalar_select 0, %s13, %s11
  $region1: #{tpu_custom_call.1} parent=0
    #allocation2 [shape = 'u8[8192]{0}', space=vmem, size = 0x2000, scoped, tag = 'input window, operand 0']
    #allocation3 [shape = 's32[2]{0}', space=sflag, size = 0x8, scoped, tag = 'scoped memory for tpu_custom_call.1']
    #allocation4 [shape = 's32[2]{0}', space=sflag, size = 0x8, scoped, tag = 'scoped memory for tpu_custom_call.1']
    #allocation5 [shape = 'u8[16384]{0}', space=vmem, size = 0x4000, scoped, tag = 'input window, operand 1, single buffered']
    #allocation6 [shape = 's32[1]{0}', space=sflag, size = 0x4, scoped, tag = 'scoped memory for tpu_custom_call.1']
    #allocation7 [shape = 'u8[16384]{0}', space=vmem, size = 0x4000, scoped, tag = 'input window, operand 3, single buffered']
    #allocation8 [shape = 'u8[16384]{0}', space=vmem, size = 0x4000, scoped, tag = 'input window, operand 5, single buffered']
    #allocation9 [shape = 's32[1]{0}', space=sflag, size = 0x4, scoped, tag = 'scoped memory for tpu_custom_call.1']
    #allocation10 [shape = 'u8[32768]{0}', space=vmem, size = 0x8000, scoped, tag = 'output window, operand 0']
    #allocation11 [shape = 'u8[32768]{0}', space=vmem, size = 0x8000, scoped, tag = 'output window, operand 1']
    #allocation12 [shape = 's32[2]{0}', space=sflag, size = 0x8, scoped, tag = 'scoped memory for tpu_custom_call.1']
    #allocation13 [shape = 'u8[32768]{0}', space=vmem, size = 0x8000, scoped, tag = 'output window, operand 2']
    %15 = vsyncpa [#allocation3], 0
    %s16 = scalar_lea.sflag [#allocation3], 1
    %17 = vsyncpa %s16, 0
    %18 = vsyncpa [#allocation6], 0
    %19 = vsyncpa [#allocation9], 0
    %20 = vsyncpa [#allocation4], 0
    %s21 = scalar_lea.sflag [#allocation4], 1
    %22 = vsyncpa %s21, 0
    %23 = vsyncpa [#allocation12], 0
    %s24 = scalar_lea.sflag [#allocation12], 1
    %25 = vsyncpa %s24, 0
    loop: start=0, step=1, limit=4
    $region2: #{tpu_custom_call.1} parent=1 // loop_pre_header
      _
    $region3: #{tpu_custom_call.1} parent=1 // loop_header
      %s27 = sphi 0, %s31
      %p28 = scmp.ge.s32.totalorder %s27, 4
      %s34 = sphi 0, %s46
      %s35 = sphi 0, %s42
      %s36 = sphi 0, %s34
      %s37 = sphi 0, %s35
      %s38 = sphi 0, %s36
      %s39 = sphi 0, %s37
      %s49 = sphi 0, %s51
      %s52 = sphi 0, %s49
      %s53 = sphi 0, %s52
      %s69 = sphi 0, %s53
      %s75 = sphi 0, %s77
      %s78 = sphi 0, %s75
      %s79 = sphi 0, %s78
      %s95 = sphi 0, %s79
      %s101 = sphi 0, %s103
      %s104 = sphi 0, %s101
      %s105 = sphi 0, %s104
      %s121 = sphi 0, %s105
      %s127 = sphi 0, %s129
      %s130 = sphi 0, %s127
      %s131 = sphi 0, %s130
      %s147 = sphi 0, %s131
      %s153 = sphi 0, %s155
      %s156 = sphi 0, %s153
      %s157 = sphi 0, %s156
      %s173 = sphi 0, %s157
      %s179 = sphi 0, %s181
      %s182 = sphi 0, %s179
      %s183 = sphi 0, %s182
      %s199 = sphi 0, %s183
      %s205 = sphi 0, %s207
      %s208 = sphi 0, %s205
      %s209 = sphi 0, %s208
      %s225 = sphi 0, %s209
      %s233 = sphi 0, %s235
      %s236 = sphi 0, %s233
      %s237 = sphi 0, %s236
      %s253 = sphi 0, %s237
      %s261 = sphi 0, %s263
      %s264 = sphi 0, %s261
      %s265 = sphi 0, %s264
      %s281 = sphi 0, %s265
      %s289 = sphi 0, %s291
      %s292 = sphi 0, %s289
      %s293 = sphi 0, %s292
      %s309 = sphi 0, %s293
    $region4: #{tpu_custom_call.1} parent=1 // loop_header_branch
      %30 = sbr.rel (%p28) target = $region8
    $region5: #{tpu_custom_call.1} parent=1 // loop_body
      %s32 = ssub.s32 %s27, 1
      %s33 = ssub.s32 %s27, 2
      %s40 = sadd.s32 1, %s35
      %p41 = scmp.ge.s32.totalorder %s40, 1
      %s42 = scalar_select %p41, 0, %s40
      %s43 = sadd.s32 1, %s34
      %s44 = scalar_select %p41, %s43, %s34
      %p45 = scmp.ge.s32.totalorder %s44, 2
      %s46 = scalar_select %p45, 0, %s44
      %s47 = ssub.s32 %s34, %s46
      %p48 = scmp.eq.s32.totalorder %s47, 0
      %s50 = sadd.s32 %s49, 1
      %s51 = scalar_select %p48, %s49, %s50
      %p54 = pneg %p48
      %p55 = scmp.eq.s32.totalorder %s27, 1
      %p56 = por %p54, %p55
      %p57 = scmp.ne.s32.totalorder %s49, %s52
      %p58 = scmp.eq.s32.totalorder %s27, 0
      %p59 = por %p57, %p58
      %p60 = scmp.ne.s32.totalorder %s49, %s52
      %p61 = scmp.eq.s32.totalorder %s32, 1
      %p62 = por %p60, %p61
      %p63 = scmp.ne.s32.totalorder %s52, %s53
      %p64 = scmp.eq.s32.totalorder %s32, 0
      %p65 = por %p63, %p64
      %p66 = scmp.ne.s32.totalorder %s52, %s53
      %p67 = scmp.eq.s32.totalorder %s33, 1
      %p68 = por %p66, %p67
      %p70 = scmp.ne.s32.totalorder %s53, %s69
      %p71 = scmp.eq.s32.totalorder %s33, 0
      %p72 = por %p70, %p71
      %s73 = ssub.s32 %s35, %s42
      %p74 = scmp.eq.s32.totalorder %s73, 0
      %s76 = sadd.s32 %s75, 1
      %s77 = scalar_select %p74, %s75, %s76
      %p80 = pneg %p74
      %p81 = scmp.eq.s32.totalorder %s27, 1
      %p82 = por %p80, %p81
      %p83 = scmp.ne.s32.totalorder %s75, %s78
      %p84 = scmp.eq.s32.totalorder %s27, 0
      %p85 = por %p83, %p84
      %p86 = scmp.ne.s32.totalorder %s75, %s78
      %p87 = scmp.eq.s32.totalorder %s32, 1
      %p88 = por %p86, %p87
      %p89 = scmp.ne.s32.totalorder %s78, %s79
      %p90 = scmp.eq.s32.totalorder %s32, 0
      %p91 = por %p89, %p90
      %p92 = scmp.ne.s32.totalorder %s78, %s79
      %p93 = scmp.eq.s32.totalorder %s33, 1
      %p94 = por %p92, %p93
      %p96 = scmp.ne.s32.totalorder %s79, %s95
      %p97 = scmp.eq.s32.totalorder %s33, 0
      %p98 = por %p96, %p97
      %s99 = ssub.s32 %s35, %s42
      %p100 = scmp.eq.s32.totalorder %s99, 0
      %s102 = sadd.s32 %s101, 1
      %s103 = scalar_select %p100, %s101, %s102
      %p106 = pneg %p100
      %p107 = scmp.eq.s32.totalorder %s27, 1
      %p108 = por %p106, %p107
      %p109 = scmp.ne.s32.totalorder %s101, %s104
      %p110 = scmp.eq.s32.totalorder %s27, 0
      %p111 = por %p109, %p110
      %p112 = scmp.ne.s32.totalorder %s101, %s104
      %p113 = scmp.eq.s32.totalorder %s32, 1
      %p114 = por %p112, %p113
      %p115 = scmp.ne.s32.totalorder %s104, %s105
      %p116 = scmp.eq.s32.totalorder %s32, 0
      %p117 = por %p115, %p116
      %p118 = scmp.ne.s32.totalorder %s104, %s105
      %p119 = scmp.eq.s32.totalorder %s33, 1
      %p120 = por %p118, %p119
      %p122 = scmp.ne.s32.totalorder %s105, %s121
      %p123 = scmp.eq.s32.totalorder %s33, 0
      %p124 = por %p122, %p123
      %s125 = ssub.s32 %s35, %s42
      %p126 = scmp.eq.s32.totalorder %s125, 0
      %s128 = sadd.s32 %s127, 1
      %s129 = scalar_select %p126, %s127, %s128
      %p132 = pneg %p126
      %p133 = scmp.eq.s32.totalorder %s27, 1
      %p134 = por %p132, %p133
      %p135 = scmp.ne.s32.totalorder %s127, %s130
      %p136 = scmp.eq.s32.totalorder %s27, 0
      %p137 = por %p135, %p136
      %p138 = scmp.ne.s32.totalorder %s127, %s130
      %p139 = scmp.eq.s32.totalorder %s32, 1
      %p140 = por %p138, %p139
      %p141 = scmp.ne.s32.totalorder %s130, %s131
      %p142 = scmp.eq.s32.totalorder %s32, 0
      %p143 = por %p141, %p142
      %p144 = scmp.ne.s32.totalorder %s130, %s131
      %p145 = scmp.eq.s32.totalorder %s33, 1
      %p146 = por %p144, %p145
      %p148 = scmp.ne.s32.totalorder %s131, %s147
      %p149 = scmp.eq.s32.totalorder %s33, 0
      %p150 = por %p148, %p149
      %s151 = ssub.s32 %s35, %s42
      %p152 = scmp.eq.s32.totalorder %s151, 0
      %s154 = sadd.s32 %s153, 1
      %s155 = scalar_select %p152, %s153, %s154
      %p158 = pneg %p152
      %p159 = scmp.eq.s32.totalorder %s27, 1
      %p160 = por %p158, %p159
      %p161 = scmp.ne.s32.totalorder %s153, %s156
      %p162 = scmp.eq.s32.totalorder %s27, 0
      %p163 = por %p161, %p162
      %p164 = scmp.ne.s32.totalorder %s153, %s156
      %p165 = scmp.eq.s32.totalorder %s32, 1
      %p166 = por %p164, %p165
      %p167 = scmp.ne.s32.totalorder %s156, %s157
      %p168 = scmp.eq.s32.totalorder %s32, 0
      %p169 = por %p167, %p168
      %p170 = scmp.ne.s32.totalorder %s156, %s157
      %p171 = scmp.eq.s32.totalorder %s33, 1
      %p172 = por %p170, %p171
      %p174 = scmp.ne.s32.totalorder %s157, %s173
      %p175 = scmp.eq.s32.totalorder %s33, 0
      %p176 = por %p174, %p175
      %s177 = ssub.s32 %s35, %s42
      %p178 = scmp.eq.s32.totalorder %s177, 0
      %s180 = sadd.s32 %s179, 1
      %s181 = scalar_select %p178, %s179, %s180
      %p184 = pneg %p178
      %p185 = scmp.eq.s32.totalorder %s27, 1
      %p186 = por %p184, %p185
      %p187 = scmp.ne.s32.totalorder %s179, %s182
      %p188 = scmp.eq.s32.totalorder %s27, 0
      %p189 = por %p187, %p188
      %p190 = scmp.ne.s32.totalorder %s179, %s182
      %p191 = scmp.eq.s32.totalorder %s32, 1
      %p192 = por %p190, %p191
      %p193 = scmp.ne.s32.totalorder %s182, %s183
      %p194 = scmp.eq.s32.totalorder %s32, 0
      %p195 = por %p193, %p194
      %p196 = scmp.ne.s32.totalorder %s182, %s183
      %p197 = scmp.eq.s32.totalorder %s33, 1
      %p198 = por %p196, %p197
      %p200 = scmp.ne.s32.totalorder %s183, %s199
      %p201 = scmp.eq.s32.totalorder %s33, 0
      %p202 = por %p200, %p201
      %s203 = ssub.s32 %s35, %s42
      %p204 = scmp.eq.s32.totalorder %s203, 0
      %s206 = sadd.s32 %s205, 1
      %s207 = scalar_select %p204, %s205, %s206
      %p210 = pneg %p204
      %p211 = scmp.eq.s32.totalorder %s27, 1
      %p212 = por %p210, %p211
      %p213 = scmp.ne.s32.totalorder %s205, %s208
      %p214 = scmp.eq.s32.totalorder %s27, 0
      %p215 = por %p213, %p214
      %p216 = scmp.ne.s32.totalorder %s205, %s208
      %p217 = scmp.eq.s32.totalorder %s32, 1
      %p218 = por %p216, %p217
      %p219 = scmp.ne.s32.totalorder %s208, %s209
      %p220 = scmp.eq.s32.totalorder %s32, 0
      %p221 = por %p219, %p220
      %p222 = scmp.ne.s32.totalorder %s208, %s209
      %p223 = scmp.eq.s32.totalorder %s33, 1
      %p224 = por %p222, %p223
      %p226 = scmp.ne.s32.totalorder %s209, %s225
      %p227 = scmp.eq.s32.totalorder %s33, 0
      %p228 = por %p226, %p227
      %s229 = ssub.s32 %s34, %s46
      %s230 = ssub.s32 %s35, %s42
      %s231 = sor.u32 %s229, %s230
      %p232 = scmp.eq.s32.totalorder %s231, 0
      %s234 = sadd.s32 %s233, 1
      %s235 = scalar_select %p232, %s233, %s234
      %p238 = pneg %p232
      %p239 = scmp.eq.s32.totalorder %s27, 1
      %p240 = por %p238, %p239
      %p241 = scmp.ne.s32.totalorder %s233, %s236
      %p242 = scmp.eq.s32.totalorder %s27, 0
      %p243 = por %p241, %p242
      %p244 = scmp.ne.s32.totalorder %s233, %s236
      %p245 = scmp.eq.s32.totalorder %s32, 1
      %p246 = por %p244, %p245
      %p247 = scmp.ne.s32.totalorder %s236, %s237
      %p248 = scmp.eq.s32.totalorder %s32, 0
      %p249 = por %p247, %p248
      %p250 = scmp.ne.s32.totalorder %s236, %s237
      %p251 = scmp.eq.s32.totalorder %s33, 1
      %p252 = por %p250, %p251
      %p254 = scmp.ne.s32.totalorder %s237, %s253
      %p255 = scmp.eq.s32.totalorder %s33, 0
      %p256 = por %p254, %p255
      %s257 = ssub.s32 %s34, %s46
      %s258 = ssub.s32 %s35, %s42
      %s259 = sor.u32 %s257, %s258
      %p260 = scmp.eq.s32.totalorder %s259, 0
      %s262 = sadd.s32 %s261, 1
      %s263 = scalar_select %p260, %s261, %s262
      %p266 = pneg %p260
      %p267 = scmp.eq.s32.totalorder %s27, 1
      %p268 = por %p266, %p267
      %p269 = scmp.ne.s32.totalorder %s261, %s264
      %p270 = scmp.eq.s32.totalorder %s27, 0
      %p271 = por %p269, %p270
      %p272 = scmp.ne.s32.totalorder %s261, %s264
      %p273 = scmp.eq.s32.totalorder %s32, 1
      %p274 = por %p272, %p273
      %p275 = scmp.ne.s32.totalorder %s264, %s265
      %p276 = scmp.eq.s32.totalorder %s32, 0
      %p277 = por %p275, %p276
      %p278 = scmp.ne.s32.totalorder %s264, %s265
      %p279 = scmp.eq.s32.totalorder %s33, 1
      %p280 = por %p278, %p279
      %p282 = scmp.ne.s32.totalorder %s265, %s281
      %p283 = scmp.eq.s32.totalorder %s33, 0
      %p284 = por %p282, %p283
      %s285 = ssub.s32 %s34, %s46
      %s286 = ssub.s32 %s35, %s42
      %s287 = sor.u32 %s285, %s286
      %p288 = scmp.eq.s32.totalorder %s287, 0
      %s290 = sadd.s32 %s289, 1
      %s291 = scalar_select %p288, %s289, %s290
      %p294 = pneg %p288
      %p295 = scmp.eq.s32.totalorder %s27, 1
      %p296 = por %p294, %p295
      %p297 = scmp.ne.s32.totalorder %s289, %s292
      %p298 = scmp.eq.s32.totalorder %s27, 0
      %p299 = por %p297, %p298
      %p300 = scmp.ne.s32.totalorder %s289, %s292
      %p301 = scmp.eq.s32.totalorder %s32, 1
      %p302 = por %p300, %p301
      %p303 = scmp.ne.s32.totalorder %s292, %s293
      %p304 = scmp.eq.s32.totalorder %s32, 0
      %p305 = por %p303, %p304
      %p306 = scmp.ne.s32.totalorder %s292, %s293
      %p307 = scmp.eq.s32.totalorder %s33, 1
      %p308 = por %p306, %p307
      %p310 = scmp.ne.s32.totalorder %s293, %s309
      %p311 = scmp.eq.s32.totalorder %s33, 0
      %p312 = por %p310, %p311
      %p313 = scmp.le.s32.totalorder 1, %s27
      %p314 = scmp.lt.s32.totalorder %s27, 3
      %p315 = pnand %p313, %p314
      %p316 = pneg %p315
      // Predicated region
      $region9: #{tpu_custom_call.1} parent=5 // pred_check
        _
      $region10: #{tpu_custom_call.1} parent=5 // pred_check_branch
        %318 = sbr.rel (%p315) target = $region12
      $region11: #{tpu_custom_call.1} parent=5 // pred_region
        %s319 = ssub.s32 %s27, 1
        // Predicated region
        $region13: #{tpu_custom_call.1} parent=11 // pred_check
          %p320 = pneg %p91
        $region14: #{tpu_custom_call.1} parent=11 // pred_check_branch
          %322 = sbr.rel (%p320) target = $region16
        $region15: #{tpu_custom_call.1} parent=11 // pred_region
          %s324 = ssub.s32 512, 512
          %325 = vsyncadd [#allocation6], %s324
          %s326 = smul.addr %s37, 4
          %s327 = smul.addr %s326, 128
          %s328 = scalar_lea.hbm %s1, %s327
          %s329 = sshll.u32 [#allocation5], 4
          %s330 = int_to_ptr.vmem [resolvable:$true] %s329
          %335 = dma.hbm_to_vmem [thread:$0]  %s328, 512, %s330, [#allocation6], 128, 128, 8
        $region16: #{tpu_custom_call.1} parent=11 // pred_fallthru
          _
        // Predicated region
        $region17: #{tpu_custom_call.1} parent=11 // pred_check
          %p336 = pneg %p117
        $region18: #{tpu_custom_call.1} parent=11 // pred_check_branch
          %338 = sbr.rel (%p336) target = $region20
        $region19: #{tpu_custom_call.1} parent=11 // pred_region
          %p339 = scmp.lt.s32.totalorder %s37, 0
          %s340 = scalar_select %p339, %s37, 0
          %s341 = scalar_lea.vmem %s2, %s340
        $region20: #{tpu_custom_call.1} parent=11 // pred_fallthru
          _
        // Predicated region
        $region21: #{tpu_custom_call.1} parent=11 // pred_check
          %p342 = pneg %p143
        $region22: #{tpu_custom_call.1} parent=11 // pred_check_branch
          %344 = sbr.rel (%p342) target = $region24
        $region23: #{tpu_custom_call.1} parent=11 // pred_region
          %s346 = ssub.s32 512, 512
          %347 = vsyncadd [#allocation6], %s346
          %s348 = smul.addr %s37, 4
          %s349 = smul.addr %s348, 128
          %s350 = scalar_lea.hbm %s3, %s349
          %s351 = sshll.u32 [#allocation7], 4
          %s352 = int_to_ptr.vmem [resolvable:$true] %s351
          %357 = dma.hbm_to_vmem [thread:$0]  %s350, 512, %s352, [#allocation6], 128, 128, 8
        $region24: #{tpu_custom_call.1} parent=11 // pred_fallthru
          _
        // Predicated region
        $region25: #{tpu_custom_call.1} parent=11 // pred_check
          %p358 = pneg %p169
        $region26: #{tpu_custom_call.1} parent=11 // pred_check_branch
          %360 = sbr.rel (%p358) target = $region28
        $region27: #{tpu_custom_call.1} parent=11 // pred_region
          %p361 = scmp.lt.s32.totalorder %s37, 0
          %s362 = scalar_select %p361, %s37, 0
          %s363 = scalar_lea.vmem %s4, %s362
        $region28: #{tpu_custom_call.1} parent=11 // pred_fallthru
          _
        // Predicated region
        $region29: #{tpu_custom_call.1} parent=11 // pred_check
          %p364 = pneg %p195
        $region30: #{tpu_custom_call.1} parent=11 // pred_check_branch
          %366 = sbr.rel (%p364) target = $region32
        $region31: #{tpu_custom_call.1} parent=11 // pred_region
          %s368 = ssub.s32 512, 512
          %369 = vsyncadd [#allocation9], %s368
          %s370 = smul.addr %s37, 4
          %s371 = smul.addr %s370, 128
          %s372 = scalar_lea.hbm %s5, %s371
          %s373 = sshll.u32 [#allocation8], 4
          %s374 = int_to_ptr.vmem [resolvable:$true] %s373
          %379 = dma.hbm_to_vmem [thread:$0]  %s372, 512, %s374, [#allocation9], 128, 128, 8
        $region32: #{tpu_custom_call.1} parent=11 // pred_fallthru
          _
        // Predicated region
        $region33: #{tpu_custom_call.1} parent=11 // pred_check
          %p380 = pneg %p221
        $region34: #{tpu_custom_call.1} parent=11 // pred_check_branch
          %382 = sbr.rel (%p380) target = $region36
        $region35: #{tpu_custom_call.1} parent=11 // pred_region
          %p383 = scmp.lt.s32.totalorder %s37, 0
          %s384 = scalar_select %p383, %s37, 0
          %s385 = scalar_lea.vmem %s6, %s384
        $region36: #{tpu_custom_call.1} parent=11 // pred_fallthru
          _
      $region12: #{tpu_custom_call.1} parent=5 // pred_fallthru
        _
      %p386 = scmp.lt.s32.totalorder %s27, 2
      // Predicated region
      $region37: #{tpu_custom_call.1} parent=5 // pred_check
        %p387 = pneg %p386
      $region38: #{tpu_custom_call.1} parent=5 // pred_check_branch
        %389 = sbr.rel (%p387) target = $region40
      $region39: #{tpu_custom_call.1} parent=5 // pred_region
        // Predicated region
        $region41: #{tpu_custom_call.1} parent=39 // pred_check
          %p390 = pneg %p59
        $region42: #{tpu_custom_call.1} parent=39 // pred_check_branch
          %392 = sbr.rel (%p390) target = $region44
        $region43: #{tpu_custom_call.1} parent=39 // pred_region
          %s393 = sand.u32 %s49, 1
          %s394 = scalar_lea.sflag [#allocation3], %s393
          %s395 = sand.u32 %s49, 1
          %s396 = smul.addr %s395, 8
          %s397 = scalar_lea.vmem [#allocation2], %s396
          %s399 = ssub.s32 128, 128
          %400 = vsyncadd %s394, %s399
          %s401 = smul.addr %s34, 128
          %s402 = scalar_lea.hbm %s0, %s401
          %s404 = sshll.u32 %s397, 4
          %s405 = int_to_ptr.vmem [resolvable:$true] %s404
          %407 = dma.hbm_to_vmem [thread:$0]  %s402, 128, %s405, %s394
        $region44: #{tpu_custom_call.1} parent=39 // pred_fallthru
          _
      $region40: #{tpu_custom_call.1} parent=5 // pred_fallthru
        _
      %p408 = scmp.le.s32.totalorder 1, %s27
      %p409 = scmp.lt.s32.totalorder %s27, 3
      %p410 = pnand %p408, %p409
      %p411 = pneg %p410
      // Predicated region
      $region45: #{tpu_custom_call.1} parent=5 // pred_check
        _
      $region46: #{tpu_custom_call.1} parent=5 // pred_check_branch
        %413 = sbr.rel (%p410) target = $region48
      $region47: #{tpu_custom_call.1} parent=5 // pred_region
        %s414 = ssub.s32 %s27, 1
        %s415 = sand.u32 %s52, 1
        %s416 = scalar_lea.sflag [#allocation3], %s415
        %s417 = sand.u32 %s52, 1
        %s418 = smul.addr %s417, 8
        %s419 = scalar_lea.vmem [#allocation2], %s418
        // Predicated region
        $region49: #{tpu_custom_call.1} parent=47 // pred_check
          %p420 = pneg %p65
        $region50: #{tpu_custom_call.1} parent=47 // pred_check_branch
          %422 = sbr.rel (%p420) target = $region52
        $region51: #{tpu_custom_call.1} parent=47 // pred_region
          %423 = dma.done %s416, 128
        $region52: #{tpu_custom_call.1} parent=47 // pred_fallthru
          _
        // Predicated region
        $region53: #{tpu_custom_call.1} parent=47 // pred_check
          %p424 = pneg %p91
        $region54: #{tpu_custom_call.1} parent=47 // pred_check_branch
          %426 = sbr.rel (%p424) target = $region56
        $region55: #{tpu_custom_call.1} parent=47 // pred_region
          %427 = dma.done [#allocation6], 512
        $region56: #{tpu_custom_call.1} parent=47 // pred_fallthru
          _
        // Predicated region
        $region57: #{tpu_custom_call.1} parent=47 // pred_check
          %p428 = pneg %p143
        $region58: #{tpu_custom_call.1} parent=47 // pred_check_branch
          %430 = sbr.rel (%p428) target = $region60
        $region59: #{tpu_custom_call.1} parent=47 // pred_region
          %431 = dma.done [#allocation6], 512
        $region60: #{tpu_custom_call.1} parent=47 // pred_fallthru
          _
        // Predicated region
        $region61: #{tpu_custom_call.1} parent=47 // pred_check
          %p432 = pneg %p195
        $region62: #{tpu_custom_call.1} parent=47 // pred_check_branch
          %434 = sbr.rel (%p432) target = $region64
        $region63: #{tpu_custom_call.1} parent=47 // pred_region
          %435 = dma.done [#allocation9], 512
        $region64: #{tpu_custom_call.1} parent=47 // pred_fallthru
          _
        %s436 = sand.u32 %s52, 1
        %s437 = scalar_lea.sflag [#allocation3], %s436
        %s438 = sand.u32 %s52, 1
        %s439 = smul.addr %s438, 8
        %s440 = scalar_lea.vmem [#allocation2], %s439
        %p441 = pneg %p65
        %p442 = pneg %p62
        %p443 = pneg %p91
        %p444 = pneg %p88
        %p445 = scmp.lt.s32.totalorder %s37, 0
        %s446 = scalar_select %p445, %s37, 0
        %s447 = scalar_lea.vmem %s2, %s446
        %p448 = pneg %p117
        %p449 = pneg %p114
        %p450 = pneg %p143
        %p451 = pneg %p140
        %p452 = scmp.lt.s32.totalorder %s37, 0
        %s453 = scalar_select %p452, %s37, 0
        %s454 = scalar_lea.vmem %s4, %s453
        %p455 = pneg %p169
        %p456 = pneg %p166
        %p457 = pneg %p195
        %p458 = pneg %p192
        %p459 = scmp.lt.s32.totalorder %s37, 0
        %s460 = scalar_select %p459, %s37, 0
        %s461 = scalar_lea.vmem %s6, %s460
        %p462 = pneg %p221
        %p463 = pneg %p218
        %p464 = pneg %p249
        %p465 = pneg %p246
        %s466 = sand.u32 %s236, 1
        %s467 = scalar_lea.sflag [#allocation4], %s466
        %s468 = sand.u32 %s236, 1
        %s469 = smul.addr %s468, 32
        %s470 = scalar_lea.vmem [#allocation10], %s469
        %p471 = pneg %p277
        %p472 = pneg %p274
        %s473 = sand.u32 %s32, 1
        %s474 = scalar_lea.sflag [#allocation12], %s473
        %s475 = sand.u32 %s264, 1
        %s476 = smul.addr %s475, 32
        %s477 = scalar_lea.vmem [#allocation11], %s476
        %p478 = pneg %p305
        %p479 = pneg %p302
        %s480 = sand.u32 %s32, 1
        %s481 = scalar_lea.sflag [#allocation12], %s480
        %s482 = sand.u32 %s292, 1
        %s483 = smul.addr %s482, 32
        %s484 = scalar_lea.vmem [#allocation13], %s483
        %p485 = scmp.lt.s32.totalorder %s37, 0
        %s486 = scalar_select %p485, %s37, 0
        %s487 = scalar_lea.vmem %s2, %s486
        %p488 = scmp.lt.s32.totalorder %s37, 0
        %s489 = scalar_select %p488, %s37, 0
        %s490 = scalar_lea.vmem %s4, %s489
        %p491 = scmp.lt.s32.totalorder %s37, 0
        %s492 = scalar_select %p491, %s37, 0
        %s493 = scalar_lea.vmem %s6, %s492
        %s494 = smul.u32 4, %s37
        %s495 = smul.u32 4, %s37
        %s496 = smul.u32 4, %s37
        %v497 = vld [vmem:[%s419] sm:$0xff]
        %v498 = vld [vmem:[#allocation5] sm:$0xff]
        %v499 = vld [vmem:[#allocation5 + $0x8] sm:$0xff]
        %v500 = vld [vmem:[#allocation5 + $0x10] sm:$0xff]
        %v501 = vld [vmem:[#allocation5 + $0x18] sm:$0xff]
        %v502 = vld [vmem:[%s487] sm:$0x1]
        %v504 = vlaneseq
        %v505 = vshrl.u32 %v504, 7
        %v506 = vsub.s32 0, %v505
        %v507 = vrot.slane %v502, %v506
        %vm509 = vcmask 261120
        %v511 = vsel %vm509, %v497, 0
        %513 = vmatprep.subr.mxu0 0.0
        %514 = vmatpush1.msra.mxu0 %v498
        %515 = vmatprep.subr.mxu0 0.0
        %516 = vmatpush1.msra.mxu0 %v499
        %517 = vmatprep.subr.mxu0 0.0
        %518 = vmatpush1.msra.mxu0 %v500
        %519 = vmatprep.subr.mxu0 0.0
        %520 = vmatpush1.msra.mxu0 %v501
        %521 = vmatprep.subr.mxu0 0.0
        %522 = vmatpush1.msra.mxu0 0.0
        %523 = vmatprep.subr.mxu0 0.0
        %524 = vmatpush1.msra.mxu0 0.0
        %525 = vmatprep.subr.mxu0 0.0
        %526 = vmatpush1.msra.mxu0 0.0
        %527 = vmatprep.subr.mxu0 0.0
        %528 = vmatpush1.msra.mxu0 0.0
        %529 = vmatprep.subr.mxu0 0.0
        %530 = vmatpush1.msra.mxu0 0.0
        %531 = vmatprep.subr.mxu0 0.0
        %532 = vmatpush1.msra.mxu0 0.0
        %533 = vmatprep.subr.mxu0 0.0
        %534 = vmatpush1.msra.mxu0 0.0
        %535 = vmatprep.subr.mxu0 0.0
        %536 = vmatpush1.msra.mxu0 0.0
        %537 = vmatprep.subr.mxu0 0.0
        %538 = vmatpush1.msra.mxu0 0.0
        %539 = vmatprep.subr.mxu0 0.0
        %540 = vmatpush1.msra.mxu0 0.0
        %541 = vmatprep.subr.mxu0 0.0
        %542 = vmatpush1.msra.mxu0 0.0
        %543 = vmatprep.subr.mxu0 0.0
        %544 = vmatpush1.msra.mxu0 0.0
        %545 = vmatprep.subr.mxu0 0.0
        %546 = vmatpush1.msra.mxu0 0.0
        %547 = vmatprep.subr.mxu0 0.0
        %548 = vmatpush1.msra.mxu0 0.0
        %549 = vmatprep.subr.mxu0 0.0
        %550 = vmatpush1.msra.mxu0 0.0
        %551 = vmatprep.subr.mxu0 0.0
        %552 = vmatpush1.msra.mxu0 0.0
        %553 = vmatprep.subr.mxu0 0.0
        %554 = vmatpush1.msra.mxu0 0.0
        %555 = vmatprep.subr.mxu0 0.0
        %556 = vmatpush1.msra.mxu0 0.0
        %557 = vmatprep.subr.mxu0 0.0
        %558 = vmatpush1.msra.mxu0 0.0
        %559 = vmatprep.subr.mxu0 0.0
        %560 = vmatpush1.msra.mxu0 0.0
        %561 = vmatprep.subr.mxu0 0.0
        %562 = vmatpush1.msra.mxu0 0.0
        %563 = vmatprep.subr.mxu0 0.0
        %564 = vmatpush1.msra.mxu0 0.0
        %565 = vmatprep.subr.mxu0 0.0
        %566 = vmatpush1.msra.mxu0 0.0
        %567 = vmatprep.subr.mxu0 0.0
        %568 = vmatpush1.msra.mxu0 0.0
        %569 = vmatprep.subr.mxu0 0.0
        %570 = vmatpush1.msra.mxu0 0.0
        %571 = vmatprep.subr.mxu0 0.0
        %572 = vmatpush1.msra.mxu0 0.0
        %573 = vmatprep.subr.mxu0 0.0
        %574 = vmatpush1.msra.mxu0 0.0
        %575 = vmatprep.subr.mxu0 0.0
        %576 = vmatpush1.msra.mxu0 0.0
        %577 = vmatprep.mubr.f32.mxu0 0.0
        %578 = vmatmul.mubr.f32.gmra.mrb[0].mxu0 %v511
        %v579 = vpop.f32.mrb[0].mxu0
        %v580 = vadd.f32 %v507, %v579
        %v581 = vpop.f32.mrb[0].mxu0
        %582 = vdwg.mxu0
        %v583 = vld [vmem:[#allocation7] sm:$0xff]
        %v584 = vld [vmem:[#allocation7 + $0x8] sm:$0xff]
        %v585 = vld [vmem:[#allocation7 + $0x10] sm:$0xff]
        %v586 = vld [vmem:[#allocation7 + $0x18] sm:$0xff]
        %v587 = vld [vmem:[%s490] sm:$0x1]
        %v589 = vlaneseq
        %v590 = vshrl.u32 %v589, 7
        %v591 = vsub.s32 0, %v590
        %v592 = vrot.slane %v587, %v591
        %594 = vmatprep.subr.mxu0 0.0
        %595 = vmatpush1.msra.mxu0 %v583
        %596 = vmatprep.subr.mxu0 0.0
        %597 = vmatpush1.msra.mxu0 %v584
        %598 = vmatprep.subr.mxu0 0.0
        %599 = vmatpush1.msra.mxu0 %v585
        %600 = vmatprep.subr.mxu0 0.0
        %601 = vmatpush1.msra.mxu0 %v586
        %602 = vmatprep.subr.mxu0 0.0
        %603 = vmatpush1.msra.mxu0 0.0
        %604 = vmatprep.subr.mxu0 0.0
        %605 = vmatpush1.msra.mxu0 0.0
        %606 = vmatprep.subr.mxu0 0.0
        %607 = vmatpush1.msra.mxu0 0.0
        %608 = vmatprep.subr.mxu0 0.0
        %609 = vmatpush1.msra.mxu0 0.0
        %610 = vmatprep.subr.mxu0 0.0
        %611 = vmatpush1.msra.mxu0 0.0
        %612 = vmatprep.subr.mxu0 0.0
        %613 = vmatpush1.msra.mxu0 0.0
        %614 = vmatprep.subr.mxu0 0.0
        %615 = vmatpush1.msra.mxu0 0.0
        %616 = vmatprep.subr.mxu0 0.0
        %617 = vmatpush1.msra.mxu0 0.0
        %618 = vmatprep.subr.mxu0 0.0
        %619 = vmatpush1.msra.mxu0 0.0
        %620 = vmatprep.subr.mxu0 0.0
        %621 = vmatpush1.msra.mxu0 0.0
        %622 = vmatprep.subr.mxu0 0.0
        %623 = vmatpush1.msra.mxu0 0.0
        %624 = vmatprep.subr.mxu0 0.0
        %625 = vmatpush1.msra.mxu0 0.0
        %626 = vmatprep.subr.mxu0 0.0
        %627 = vmatpush1.msra.mxu0 0.0
        %628 = vmatprep.subr.mxu0 0.0
        %629 = vmatpush1.msra.mxu0 0.0
        %630 = vmatprep.subr.mxu0 0.0
        %631 = vmatpush1.msra.mxu0 0.0
        %632 = vmatprep.subr.mxu0 0.0
        %633 = vmatpush1.msra.mxu0 0.0
        %634 = vmatprep.subr.mxu0 0.0
        %635 = vmatpush1.msra.mxu0 0.0
        %636 = vmatprep.subr.mxu0 0.0
        %637 = vmatpush1.msra.mxu0 0.0
        %638 = vmatprep.subr.mxu0 0.0
        %639 = vmatpush1.msra.mxu0 0.0
        %640 = vmatprep.subr.mxu0 0.0
        %641 = vmatpush1.msra.mxu0 0.0
        %642 = vmatprep.subr.mxu0 0.0
        %643 = vmatpush1.msra.mxu0 0.0
        %644 = vmatprep.subr.mxu0 0.0
        %645 = vmatpush1.msra.mxu0 0.0
        %646 = vmatprep.subr.mxu0 0.0
        %647 = vmatpush1.msra.mxu0 0.0
        %648 = vmatprep.subr.mxu0 0.0
        %649 = vmatpush1.msra.mxu0 0.0
        %650 = vmatprep.subr.mxu0 0.0
        %651 = vmatpush1.msra.mxu0 0.0
        %652 = vmatprep.subr.mxu0 0.0
        %653 = vmatpush1.msra.mxu0 0.0
        %654 = vmatprep.subr.mxu0 0.0
        %655 = vmatpush1.msra.mxu0 0.0
        %656 = vmatprep.subr.mxu0 0.0
        %657 = vmatpush1.msra.mxu0 0.0
        %658 = vmatprep.mubr.f32.mxu0 0.0
        %659 = vmatmul.mubr.f32.gmra.mrb[0].mxu0 %v511
        %v660 = vpop.f32.mrb[0].mxu0
        %v661 = vadd.f32 %v592, %v660
        %v662 = vpop.f32.mrb[0].mxu0
        %663 = vdwg.mxu0
        %v664 = vld [vmem:[#allocation8] sm:$0xff]
        %v665 = vld [vmem:[#allocation8 + $0x8] sm:$0xff]
        %v666 = vld [vmem:[#allocation8 + $0x10] sm:$0xff]
        %v667 = vld [vmem:[#allocation8 + $0x18] sm:$0xff]
        %v668 = vld [vmem:[%s493] sm:$0x1]
        %v670 = vlaneseq
        %v671 = vshrl.u32 %v670, 7
        %v672 = vsub.s32 0, %v671
        %v673 = vrot.slane %v668, %v672
        %675 = vmatprep.subr.mxu0 0.0
        %676 = vmatpush1.msra.mxu0 %v664
        %677 = vmatprep.subr.mxu0 0.0
        %678 = vmatpush1.msra.mxu0 %v665
        %679 = vmatprep.subr.mxu0 0.0
        %680 = vmatpush1.msra.mxu0 %v666
        %681 = vmatprep.subr.mxu0 0.0
        %682 = vmatpush1.msra.mxu0 %v667
        %683 = vmatprep.subr.mxu0 0.0
        %684 = vmatpush1.msra.mxu0 0.0
        %685 = vmatprep.subr.mxu0 0.0
        %686 = vmatpush1.msra.mxu0 0.0
        %687 = vmatprep.subr.mxu0 0.0
        %688 = vmatpush1.msra.mxu0 0.0
        %689 = vmatprep.subr.mxu0 0.0
        %690 = vmatpush1.msra.mxu0 0.0
        %691 = vmatprep.subr.mxu0 0.0
        %692 = vmatpush1.msra.mxu0 0.0
        %693 = vmatprep.subr.mxu0 0.0
        %694 = vmatpush1.msra.mxu0 0.0
        %695 = vmatprep.subr.mxu0 0.0
        %696 = vmatpush1.msra.mxu0 0.0
        %697 = vmatprep.subr.mxu0 0.0
        %698 = vmatpush1.msra.mxu0 0.0
        %699 = vmatprep.subr.mxu0 0.0
        %700 = vmatpush1.msra.mxu0 0.0
        %701 = vmatprep.subr.mxu0 0.0
        %702 = vmatpush1.msra.mxu0 0.0
        %703 = vmatprep.subr.mxu0 0.0
        %704 = vmatpush1.msra.mxu0 0.0
        %705 = vmatprep.subr.mxu0 0.0
        %706 = vmatpush1.msra.mxu0 0.0
        %707 = vmatprep.subr.mxu0 0.0
        %708 = vmatpush1.msra.mxu0 0.0
        %709 = vmatprep.subr.mxu0 0.0
        %710 = vmatpush1.msra.mxu0 0.0
        %711 = vmatprep.subr.mxu0 0.0
        %712 = vmatpush1.msra.mxu0 0.0
        %713 = vmatprep.subr.mxu0 0.0
        %714 = vmatpush1.msra.mxu0 0.0
        %715 = vmatprep.subr.mxu0 0.0
        %716 = vmatpush1.msra.mxu0 0.0
        %717 = vmatprep.subr.mxu0 0.0
        %718 = vmatpush1.msra.mxu0 0.0
        %719 = vmatprep.subr.mxu0 0.0
        %720 = vmatpush1.msra.mxu0 0.0
        %721 = vmatprep.subr.mxu0 0.0
        %722 = vmatpush1.msra.mxu0 0.0
        %723 = vmatprep.subr.mxu0 0.0
        %724 = vmatpush1.msra.mxu0 0.0
        %725 = vmatprep.subr.mxu0 0.0
        %726 = vmatpush1.msra.mxu0 0.0
        %727 = vmatprep.subr.mxu0 0.0
        %728 = vmatpush1.msra.mxu0 0.0
        %729 = vmatprep.subr.mxu0 0.0
        %730 = vmatpush1.msra.mxu0 0.0
        %731 = vmatprep.subr.mxu0 0.0
        %732 = vmatpush1.msra.mxu0 0.0
        %733 = vmatprep.subr.mxu0 0.0
        %734 = vmatpush1.msra.mxu0 0.0
        %735 = vmatprep.subr.mxu0 0.0
        %736 = vmatpush1.msra.mxu0 0.0
        %737 = vmatprep.subr.mxu0 0.0
        %738 = vmatpush1.msra.mxu0 0.0
        %739 = vmatprep.mubr.f32.mxu0 0.0
        %740 = vmatmul.mubr.f32.gmra.mrb[0].mxu0 %v511
        %v741 = vpop.f32.mrb[0].mxu0
        %v742 = vadd.f32 %v673, %v741
        %v743 = vpop.f32.mrb[0].mxu0
        %744 = vdwg.mxu0
        %vm745 = vcmask 64512
        %746 = vst.msk [vmem:[%s470] sm:$0xff] %vm745, %v580
        %747 = vst.msk [vmem:[%s477] sm:$0xff] %vm745, %v661
        %748 = vst.msk [vmem:[%s484] sm:$0xff] %vm745, %v742
        %750 = vrot.lane.b32.xlu0 %v580, 120
        %v751 = vpop.permute.xlu0 %750
        %s753 = scalar_lea.vmem %s470, 8 [#allocation10]
        %754 = vst.msk [vmem:[%s753] sm:$0xff] %vm745, %v751
        %756 = vrot.lane.b32.xlu0 %v661, 120
        %v757 = vpop.permute.xlu0 %756
        %s759 = scalar_lea.vmem %s477, 8 [#allocation11]
        %760 = vst.msk [vmem:[%s759] sm:$0xff] %vm745, %v757
        %762 = vrot.lane.b32.xlu0 %v742, 120
        %v763 = vpop.permute.xlu0 %762
        %s765 = scalar_lea.vmem %s484, 8 [#allocation13]
        %766 = vst.msk [vmem:[%s765] sm:$0xff] %vm745, %v763
        %767 = vrot.lane.b32.xlu0 %v580, 112
        %v768 = vpop.permute.xlu0 %767
        %s770 = scalar_lea.vmem %s470, 16 [#allocation10]
        %771 = vst.msk [vmem:[%s770] sm:$0xff] %vm745, %v768
        %772 = vrot.lane.b32.xlu0 %v661, 112
        %v773 = vpop.permute.xlu0 %772
        %s775 = scalar_lea.vmem %s477, 16 [#allocation11]
        %776 = vst.msk [vmem:[%s775] sm:$0xff] %vm745, %v773
        %777 = vrot.lane.b32.xlu0 %v742, 112
        %v778 = vpop.permute.xlu0 %777
        %s780 = scalar_lea.vmem %s484, 16 [#allocation13]
        %781 = vst.msk [vmem:[%s780] sm:$0xff] %vm745, %v778
        %782 = vrot.lane.b32.xlu0 %v580, 104
        %v783 = vpop.permute.xlu0 %782
        %s785 = scalar_lea.vmem %s470, 24 [#allocation10]
        %786 = vst.msk [vmem:[%s785] sm:$0xff] %vm745, %v783
        %787 = vrot.lane.b32.xlu0 %v661, 104
        %v788 = vpop.permute.xlu0 %787
        %s790 = scalar_lea.vmem %s477, 24 [#allocation11]
        %791 = vst.msk [vmem:[%s790] sm:$0xff] %vm745, %v788
        %792 = vrot.lane.b32.xlu0 %v742, 104
        %v793 = vpop.permute.xlu0 %792
        %s795 = scalar_lea.vmem %s484, 24 [#allocation13]
        %796 = vst.msk [vmem:[%s795] sm:$0xff] %vm745, %v793
        %s797 = sand.u32 %s236, 1
        %s798 = scalar_lea.sflag [#allocation4], %s797
        %s799 = sand.u32 %s236, 1
        %s800 = smul.addr %s799, 32
        %s801 = scalar_lea.vmem [#allocation10], %s800
        %s802 = sand.u32 %s32, 1
        %s803 = scalar_lea.sflag [#allocation12], %s802
        %s804 = sand.u32 %s264, 1
        %s805 = smul.addr %s804, 32
        %s806 = scalar_lea.vmem [#allocation11], %s805
        %s807 = sand.u32 %s32, 1
        %s808 = scalar_lea.sflag [#allocation12], %s807
        %s809 = sand.u32 %s292, 1
        %s810 = smul.addr %s809, 32
        %s811 = scalar_lea.vmem [#allocation13], %s810
        // Predicated region
        $region65: #{tpu_custom_call.1} parent=47 // pred_check
          %p812 = pneg %p246
        $region66: #{tpu_custom_call.1} parent=47 // pred_check_branch
          %814 = sbr.rel (%p812) target = $region68
        $region67: #{tpu_custom_call.1} parent=47 // pred_region
          %s815 = smul.u32 4, %s37
          %s817 = ssub.s32 512, 512
          %818 = vsyncadd %s798, %s817
          %s819 = smul.addr %s36, 4
          %s820 = sadd.s32 %s815, %s819
          %s821 = smul.addr %s820, 128
          %s822 = scalar_lea.hbm %s7, %s821
          %s823 = sshll.u32 %s801, 4
          %s824 = int_to_ptr.vmem [resolvable:$true] %s823
          %829 = dma.vmem_to_hbm [thread:$0]  %s824, 512, %s822, %s798, 128, 128, 8
        $region68: #{tpu_custom_call.1} parent=47 // pred_fallthru
          _
        // Predicated region
        $region69: #{tpu_custom_call.1} parent=47 // pred_check
          %p830 = pneg %p274
        $region70: #{tpu_custom_call.1} parent=47 // pred_check_branch
          %832 = sbr.rel (%p830) target = $region72
        $region71: #{tpu_custom_call.1} parent=47 // pred_region
          %s833 = smul.u32 4, %s37
          %s835 = ssub.s32 512, 512
          %836 = vsyncadd %s803, %s835
          %s837 = smul.addr %s36, 4
          %s838 = sadd.s32 %s833, %s837
          %s839 = smul.addr %s838, 128
          %s840 = scalar_lea.hbm %s8, %s839
          %s841 = sshll.u32 %s806, 4
          %s842 = int_to_ptr.vmem [resolvable:$true] %s841
          %847 = dma.vmem_to_hbm [thread:$0]  %s842, 512, %s840, %s803, 128, 128, 8
        $region72: #{tpu_custom_call.1} parent=47 // pred_fallthru
          _
        // Predicated region
        $region73: #{tpu_custom_call.1} parent=47 // pred_check
          %p848 = pneg %p302
        $region74: #{tpu_custom_call.1} parent=47 // pred_check_branch
          %850 = sbr.rel (%p848) target = $region76
        $region75: #{tpu_custom_call.1} parent=47 // pred_region
          %s851 = smul.u32 4, %s37
          %s853 = ssub.s32 512, 512
          %854 = vsyncadd %s808, %s853
          %s855 = smul.addr %s36, 4
          %s856 = sadd.s32 %s851, %s855
          %s857 = smul.addr %s856, 128
          %s858 = scalar_lea.hbm %s9, %s857
          %s859 = sshll.u32 %s811, 4
          %s860 = int_to_ptr.vmem [resolvable:$true] %s859
          %865 = dma.vmem_to_hbm [thread:$0]  %s860, 512, %s858, %s808, 128, 128, 8
        $region76: #{tpu_custom_call.1} parent=47 // pred_fallthru
          _
      $region48: #{tpu_custom_call.1} parent=5 // pred_fallthru
        _
      %p866 = scmp.le.s32.totalorder 2, %s27
      // Predicated region
      $region77: #{tpu_custom_call.1} parent=5 // pred_check
        %p867 = pneg %p866
      $region78: #{tpu_custom_call.1} parent=5 // pred_check_branch
        %869 = sbr.rel (%p867) target = $region80
      $region79: #{tpu_custom_call.1} parent=5 // pred_region
        %s870 = ssub.s32 %s27, 2
        // Predicated region
        $region81: #{tpu_custom_call.1} parent=79 // pred_check
          %p871 = pneg %p252
        $region82: #{tpu_custom_call.1} parent=79 // pred_check_branch
          %873 = sbr.rel (%p871) target = $region84
        $region83: #{tpu_custom_call.1} parent=79 // pred_region
          %s874 = sand.u32 %s237, 1
          %s875 = scalar_lea.sflag [#allocation4], %s874
          %s876 = sand.u32 %s237, 1
          %s877 = smul.addr %s876, 32
          %s878 = scalar_lea.vmem [#allocation10], %s877
          %879 = dma.done %s875, 512
        $region84: #{tpu_custom_call.1} parent=79 // pred_fallthru
          _
        // Predicated region
        $region85: #{tpu_custom_call.1} parent=79 // pred_check
          %p880 = pneg %p280
        $region86: #{tpu_custom_call.1} parent=79 // pred_check_branch
          %882 = sbr.rel (%p880) target = $region88
        $region87: #{tpu_custom_call.1} parent=79 // pred_region
          %s883 = sand.u32 %s33, 1
          %s884 = scalar_lea.sflag [#allocation12], %s883
          %s885 = sand.u32 %s265, 1
          %s886 = smul.addr %s885, 32
          %s887 = scalar_lea.vmem [#allocation11], %s886
          %888 = dma.done %s884, 512
        $region88: #{tpu_custom_call.1} parent=79 // pred_fallthru
          _
        // Predicated region
        $region89: #{tpu_custom_call.1} parent=79 // pred_check
          %p889 = pneg %p308
        $region90: #{tpu_custom_call.1} parent=79 // pred_check_branch
          %891 = sbr.rel (%p889) target = $region92
        $region91: #{tpu_custom_call.1} parent=79 // pred_region
          %s892 = sand.u32 %s33, 1
          %s893 = scalar_lea.sflag [#allocation12], %s892
          %s894 = sand.u32 %s293, 1
          %s895 = smul.addr %s894, 32
          %s896 = scalar_lea.vmem [#allocation13], %s895
          %897 = dma.done %s893, 512
        $region92: #{tpu_custom_call.1} parent=79 // pred_fallthru
          _
      $region80: #{tpu_custom_call.1} parent=5 // pred_fallthru
        _
    $region6: #{tpu_custom_call.1} parent=1 // loop_footer
      %s31 = sadd.s32 1, %s27
    $region7: #{tpu_custom_call.1} parent=1 // loop_footer_branch
      %26 = sbr.rel target = $region3
    $region8: #{tpu_custom_call.1} parent=1 // loop_exit
      _
    %898 = vsyncpa [#allocation3], 1
    %s899 = scalar_lea.sflag [#allocation3], 1
    %900 = vsyncpa %s899, 1
    %901 = vsyncpa [#allocation6], 1
    %902 = vsyncpa [#allocation9], 1
    %903 = vsyncpa [#allocation4], 1
    %s904 = scalar_lea.sflag [#allocation4], 1
    %905 = vsyncpa %s904, 1
    %906 = vsyncpa [#allocation12], 1
    %s907 = scalar_lea.sflag [#allocation12], 1
    %908 = vsyncpa %s907, 1

</llo_original>
